<compile_context>
chip_gen: v7x
topology: tpu7x:2x2x1
jax: 0.10.0
libtpu: 0.0.40
codegen_flags: <defaults>
</compile_context>

<pallas_src>
import functools

import jax
import jax.numpy as jnp
from jax.experimental import pallas as pl
from jax.experimental.pallas import tpu as pltpu


def _rows_per_block(r_total, w2, c2, cout, itemsize=4, target_bytes=2 << 20):
    """Pooled-output rows per grid block: large enough to amortize the ~0.35us
    per-step overhead, small enough that double-buffered in+out blocks stay well
    inside every generation's scoped-VMEM budget (incl. v7x's 64 MiB physical);
    >=2 blocks when possible so both v7x TensorCores get work; always an exact
    divisor of r_total so no padded edge blocks are needed."""
    per_row = (2 * w2 * c2 + w2 * cout) * itemsize      # input + output bytes per out-row
    rows = max(1, min(r_total, target_bytes // max(per_row, 1)))
    if rows >= r_total and r_total >= 2:
        rows = max(1, r_total // 2)
    while r_total % rows:
        rows -= 1
    return rows


def dense_transition_kernel(x_ref, scale_ref, bias_ref, w_ref, o_ref):
    """One row-pair tile per grid step.

    x_ref:     (2*TR, W/2, 2*Cin)  input tile, adjacent W pairs packed into lanes
    scale_ref: (1, 2*Cin)          folded BN scale (duplicated for the W pairs)
    bias_ref:  (1, 2*Cin)          folded BN bias  (duplicated for the W pairs)
    w_ref:     (2*Cin, Cout)       1x1 conv weight, W-pool-duplicated, 0.25 folded in
    o_ref:     (TR, W/2, Cout)     pooled conv output tile
    """
    x = x_ref[...]                                   # (2*TR, W2, 2*Cin) f32
    s = scale_ref[...].reshape(1, 1, -1)
    b = bias_ref[...].reshape(1, 1, -1)

    # BatchNorm (folded scale/bias) + ReLU, f32 on the VPU.
    h = jnp.maximum(x * s + b, 0.0)

    two_tr, w2, c2 = h.shape
    tr = two_tr // 2

    # AvgPool over H: sum adjacent row pairs (outer-dim only, no lane/sublane shuffle).
    h = h.reshape(tr, 2, w2, c2)
    hh = h[:, 0] + h[:, 1]                           # (TR, W2, 2*Cin)

    # AvgPool over W + 1x1 conv, fused as a single (2*Cin -> Cout) MXU matmul.
    # (0.25 pool scale already folded into w_ref.)
    hw = hh.reshape(tr * w2, c2)
    wmat = w_ref[...]
    if wmat.dtype != hw.dtype:                       # optional bf16 MXU operands
        hw = hw.astype(wmat.dtype)
    y = jnp.dot(hw, wmat, preferred_element_type=jnp.float32)   # (TR*W2, Cout)

    o_ref[...] = y.reshape(tr, w2, -1).astype(o_ref.dtype)


@functools.partial(jax.jit, static_argnames=("eps", "mxu_bf16"))
def dense_transition(x_nchw, gamma, beta, conv_w, eps=1e-5, mxu_bf16=False):
    """x_nchw: (N, Cin, H, W) f32; conv_w: (Cout, Cin, 1, 1). Returns (N, Cout, H/2, W/2)."""
    N, Cin, H, W = x_nchw.shape
    Cout = conv_w.shape[0]
    H2, W2 = H // 2, W // 2
    C2 = 2 * Cin

    # Training-mode BatchNorm stats (biased variance), one fused pass over x.
    mean = jnp.mean(x_nchw, axis=(0, 2, 3))
    mean_sq = jnp.mean(jnp.square(x_nchw), axis=(0, 2, 3))
    var = mean_sq - mean * mean
    scale = gamma / jnp.sqrt(var + eps)              # (Cin,)
    bias = beta - mean * scale                       # (Cin,)

    # NCHW -> NHWC (required by the PyTorch interface at the boundary).
    # TODO(synk): with an NHWC end-to-end model both boundary transposes
    # (full-tensor HBM passes) would disappear entirely.
    x = jnp.transpose(x_nchw, (0, 2, 3, 1))          # (N, H, W, Cin)
    # Fold batch+H into one row axis and adjacent W pairs into the lane axis
    # (pure metadata reshape: contiguous row-major).
    x_flat = x.reshape(N * H, W2, C2)

    # BN scale/bias duplicated for the two W-phases packed into the lane axis.
    scale2 = jnp.concatenate([scale, scale]).reshape(1, C2)
    bias2 = jnp.concatenate([bias, bias]).reshape(1, C2)

    # 1x1 conv weight: (Cout, Cin) -> (Cin, Cout), duplicated for the W-pool,
    # pre-scaled by the 0.25 average-pool factor.
    wmat = conv_w.reshape(Cout, Cin).T
    w2mat = jnp.concatenate([wmat, wmat], axis=0) * 0.25       # (2*Cin, Cout)
    if mxu_bf16:
        # v6e/v7x: bf16 MXU operands, f32 accumulate inside the kernel.
        w2mat = w2mat.astype(jnp.bfloat16)

    r_total = N * H2                                  # total pooled output rows
    tr = _rows_per_block(r_total, W2, C2, Cout)
    grid = (r_total // tr,)

    out_flat = pl.pallas_call(
        dense_transition_kernel,
        out_shape=jax.ShapeDtypeStruct((r_total, W2, Cout), x.dtype),
        grid=grid,
        in_specs=[
            pl.BlockSpec((2 * tr, W2, C2), lambda i: (i, 0, 0)),
            pl.BlockSpec((1, C2), lambda i: (0, 0)),
            pl.BlockSpec((1, C2), lambda i: (0, 0)),
            pl.BlockSpec((C2, Cout), lambda i: (0, 0)),
        ],
        out_specs=pl.BlockSpec((tr, W2, Cout), lambda i: (i, 0, 0)),
        compiler_params=pltpu.CompilerParams(
            dimension_semantics=("parallel",),
            vmem_limit_bytes=32 * 1024 * 1024,
        ),
    )(x_flat, scale2, bias2, w2mat)

    # (N*H2, W2, Cout) -> (N, H2, W2, Cout) is free; final transpose to NCHW.
    out = out_flat.reshape(N, H2, W2, Cout)
    return jnp.transpose(out, (0, 3, 1, 2))


def dense_transition_ref(x_nchw, gamma, beta, conv_w, eps=1e-5):
    """Pure-JAX reference with the module's exact op order (BN->ReLU->conv->pool)."""
    N, Cin, H, W = x_nchw.shape
    Cout = conv_w.shape[0]
    mean = jnp.mean(x_nchw, axis=(0, 2, 3), keepdims=True)
    var = jnp.mean(jnp.square(x_nchw - mean), axis=(0, 2, 3), keepdims=True)
    xn = (x_nchw - mean) / jnp.sqrt(var + eps)
    xn = xn * gamma.reshape(1, Cin, 1, 1) + beta.reshape(1, Cin, 1, 1)
    h = jnp.maximum(xn, 0.0)
    y = jnp.einsum('nchw,oc->nohw', h, conv_w.reshape(Cout, Cin))
    y = y.reshape(N, Cout, H // 2, 2, W // 2, 2).mean(axis=(3, 5))
    return y


if __name__ == "__main__":
    key = jax.random.PRNGKey(0)
    kx, kw = jax.random.split(key)

    N, Cin, H, W = 2, 4, 16, 16
    Cout = 8

    x = jax.random.normal(kx, (N, Cin, H, W), dtype=jnp.float32)
    gamma = jnp.ones((Cin,), dtype=jnp.float32)           # BatchNorm2d default init
    beta = jnp.zeros((Cin,), dtype=jnp.float32)
    bound = 1.0 / jnp.sqrt(jnp.float32(Cin))
    conv_w = jax.random.uniform(kw, (Cout, Cin, 1, 1), dtype=jnp.float32,
                                minval=-bound, maxval=bound)

    ref = dense_transition_ref(x, gamma, beta, conv_w)

    # f32 MXU path (numerically tight vs reference)
    out = jax.block_until_ready(dense_transition(x, gamma, beta, conv_w))
    assert out.shape == (N, Cout, H // 2, W // 2), out.shape
    assert jnp.allclose(out, ref, atol=1e-5, rtol=1e-5), \
        float(jnp.max(jnp.abs(out - ref)))

    # bf16 MXU path (v6e/v7x throughput option; f32 accumulate)
    out_bf16 = jax.block_until_ready(
        dense_transition(x, gamma, beta, conv_w, mxu_bf16=True))
    assert jnp.allclose(out_bf16, ref, atol=5e-2, rtol=5e-2), \
        float(jnp.max(jnp.abs(out_bf16 - ref)))

    print("KERNEL_OK")
</pallas_src>

<mosaic_0001>
module attributes {stable_mosaic.version = 11 : i64} {
  func.func @dense_transition_kernel(%arg0: i32, %arg1: memref<16x8x8xf32, #tpu.memory_space<vmem>>, %arg2: memref<1x8xf32, #tpu.memory_space<vmem>>, %arg3: memref<1x8xf32, #tpu.memory_space<vmem>>, %arg4: memref<8x8xf32, #tpu.memory_space<vmem>>, %arg5: memref<8x8x8xf32, #tpu.memory_space<vmem>>) attributes {dimension_semantics = [#tpu.dimension_semantics<parallel>], iteration_bounds = array<i64: 2>, scalar_prefetch = 0 : i64, scratch_operands = 0 : i64, tpu.core_type = #tpu.core_type<tc>, window_params = [{transform_indices = @transform_0, window_bounds = array<i64: 16, 8, 8>}, {pipeline_mode = #tpu.pipeline_mode<synchronous>, transform_indices = @transform_1, window_bounds = array<i64: 1, 8>}, {pipeline_mode = #tpu.pipeline_mode<synchronous>, transform_indices = @transform_2, window_bounds = array<i64: 1, 8>}, {pipeline_mode = #tpu.pipeline_mode<synchronous>, transform_indices = @transform_3, window_bounds = array<i64: 8, 8>}, {transform_indices = @transform_4, window_bounds = array<i64: 8, 8, 8>}]} {
    %c0 = arith.constant 0 : index
    %c0_0 = arith.constant 0 : index
    %c0_1 = arith.constant 0 : index
    %0 = vector.load %arg1[%c0, %c0_0, %c0_1] : memref<16x8x8xf32, #tpu.memory_space<vmem>>, vector<16x8x8xf32>
    %c0_2 = arith.constant 0 : index
    %c0_3 = arith.constant 0 : index
    %1 = vector.load %arg2[%c0_2, %c0_3] : memref<1x8xf32, #tpu.memory_space<vmem>>, vector<1x8xf32>
    %2 = vector.shape_cast %1 : vector<1x8xf32> to vector<1x1x8xf32>
    %c0_4 = arith.constant 0 : index
    %c0_5 = arith.constant 0 : index
    %3 = vector.load %arg3[%c0_4, %c0_5] : memref<1x8xf32, #tpu.memory_space<vmem>>, vector<1x8xf32>
    %4 = vector.shape_cast %3 : vector<1x8xf32> to vector<1x1x8xf32>
    %5 = vector.broadcast %2 : vector<1x1x8xf32> to vector<16x8x8xf32>
    %6 = arith.mulf %0, %5 : vector<16x8x8xf32>
    %7 = vector.broadcast %4 : vector<1x1x8xf32> to vector<16x8x8xf32>
    %8 = arith.addf %6, %7 : vector<16x8x8xf32>
    %cst = arith.constant 0.000000e+00 : f32
    %9 = vector.broadcast %cst : f32 to vector<16x8x8xf32>
    %10 = arith.maximumf %8, %9 : vector<16x8x8xf32>
    %11 = vector.shape_cast %10 : vector<16x8x8xf32> to vector<8x2x8x8xf32>
    %12 = vector.extract_strided_slice %11 {offsets = [0, 0, 0, 0], sizes = [8, 1, 8, 8], strides = [1, 1, 1, 1]} : vector<8x2x8x8xf32> to vector<8x1x8x8xf32>
    %13 = vector.shape_cast %12 : vector<8x1x8x8xf32> to vector<8x8x8xf32>
    %14 = vector.extract_strided_slice %11 {offsets = [0, 1, 0, 0], sizes = [8, 1, 8, 8], strides = [1, 1, 1, 1]} : vector<8x2x8x8xf32> to vector<8x1x8x8xf32>
    %15 = vector.shape_cast %14 : vector<8x1x8x8xf32> to vector<8x8x8xf32>
    %16 = arith.addf %13, %15 : vector<8x8x8xf32>
    %17 = vector.shape_cast %16 : vector<8x8x8xf32> to vector<64x8xf32>
    %c0_6 = arith.constant 0 : index
    %c0_7 = arith.constant 0 : index
    %18 = vector.load %arg4[%c0_6, %c0_7] : memref<8x8xf32, #tpu.memory_space<vmem>>, vector<8x8xf32>
    %cst_8 = arith.constant dense<0.000000e+00> : vector<64x8xf32>
    %19 = tpu.matmul %17, %18, %cst_8 {dimension_numbers = #tpu.dot_dimension_numbers<[1], [0], [0], [1], [0, 0, 1, 1], [], []>} : vector<64x8xf32>, vector<8x8xf32>, vector<64x8xf32> -> vector<64x8xf32>
    %20 = vector.shape_cast %19 : vector<64x8xf32> to vector<8x8x8xf32>
    %c0_9 = arith.constant 0 : index
    %c0_10 = arith.constant 0 : index
    %c0_11 = arith.constant 0 : index
    %21 = vector.load %arg5[%c0_9, %c0_10, %c0_11] : memref<8x8x8xf32, #tpu.memory_space<vmem>>, vector<8x8x8xf32>
    tpu.vector_store %arg5[%c0_9, %c0_10, %c0_11], %20 {strides = array<i32>} : memref<8x8x8xf32, #tpu.memory_space<vmem>>, vector<8x8x8xf32>,
    return
  }
  func.func @transform_0(%arg0: i32) -> (i32, i32, i32) {
    %c0_i32 = arith.constant 0 : i32
    %c0_i32_0 = arith.constant 0 : i32
    %c0_i32_1 = arith.constant 0 : i32
    return %arg0, %c0_i32, %c0_i32_0 : i32, i32, i32
  }
  func.func @transform_1(%arg0: i32) -> (i32, i32) {
    %c0_i32 = arith.constant 0 : i32
    %c0_i32_0 = arith.constant 0 : i32
    %c0_i32_1 = arith.constant 0 : i32
    return %c0_i32, %c0_i32_0 : i32, i32
  }
  func.func @transform_2(%arg0: i32) -> (i32, i32) {
    %c0_i32 = arith.constant 0 : i32
    %c0_i32_0 = arith.constant 0 : i32
    %c0_i32_1 = arith.constant 0 : i32
    return %c0_i32, %c0_i32_0 : i32, i32
  }
  func.func @transform_3(%arg0: i32) -> (i32, i32) {
    %c0_i32 = arith.constant 0 : i32
    %c0_i32_0 = arith.constant 0 : i32
    %c0_i32_1 = arith.constant 0 : i32
    return %c0_i32, %c0_i32_0 : i32, i32
  }
  func.func @transform_4(%arg0: i32) -> (i32, i32, i32) {
    %c0_i32 = arith.constant 0 : i32
    %c0_i32_0 = arith.constant 0 : i32
    %c0_i32_1 = arith.constant 0 : i32
    return %arg0, %c0_i32, %c0_i32_0 : i32, i32, i32
  }
}

</mosaic_0001>

<llo_original>
// kernel: dense_transition.1
$region0: #{dense_transition.1}
  #allocation0 [shape = 'u32[]', space=smem, size = 0x4, offset = 0x4, fixed_abs, tag = 'smem constant byte address 0x4 - core index']
  #allocation1 [shape = 'u32[144,128]{1,0:T(1,128)}', space=vmem, size = 0x12000, scoped, tag = 'internal scratch']
  %s0 = inlined_call_operand.vmem [shape: f32[32,8,8], index: 0, kind: input, shape index: {}]
  %s1 = inlined_call_operand.vmem [shape: f32[1,8], index: 1, kind: input, shape index: {}]
  %s2 = inlined_call_operand.vmem [shape: f32[1,8], index: 2, kind: input, shape index: {}]
  %s3 = inlined_call_operand.vmem [shape: f32[8,8], index: 3, kind: input, shape index: {}]
  %s4 = inlined_call_operand.vmem [shape: f32[16,8,8], index: 4, kind: output, shape index: {}]
  %s5 = sld [smem:[#allocation0]]
  $region49: #{dense_transition.1} parent=0
    _
  %s7 = ssub.s32 1, %s5
  %s8 = scalar_select 0, %s7, %s5
  loop: start=0, step=1, limit=4
  $region2: #{dense_transition.1} parent=0 // loop_pre_header
    _
  $region3: #{dense_transition.1} parent=0 // loop_header
    %s10 = sphi 0, %s14
    %p11 = scmp.ge.s32.totalorder %s10, 4
    %s20 = sphi 0, %s22
    %s23 = sphi 0, %s20
    %s24 = sphi 0, %s23
    %s40 = sphi 0, %s24
    %s44 = sphi 0, %s44
    %s46 = sphi 0, %s44
    %s47 = sphi 0, %s46
    %s61 = sphi 0, %s47
    %s65 = sphi 0, %s65
    %s67 = sphi 0, %s65
    %s68 = sphi 0, %s67
    %s82 = sphi 0, %s68
    %s86 = sphi 0, %s86
    %s88 = sphi 0, %s86
    %s89 = sphi 0, %s88
    %s103 = sphi 0, %s89
    %s109 = sphi 0, %s111
    %s112 = sphi 0, %s109
    %s113 = sphi 0, %s112
    %s129 = sphi 0, %s113
  $region4: #{dense_transition.1} parent=0 // loop_header_branch
    %13 = sbr.rel (%p11) target = $region8
  $region5: #{dense_transition.1} parent=0 // loop_body
    %s15 = ssub.s32 %s10, 1
    %s16 = ssub.s32 %s10, 2
    %s17 = sadd.s32 %s10, 1
    %s18 = ssub.s32 %s10, %s17
    %p19 = scmp.eq.s32.totalorder %s18, 0
    %s21 = sadd.s32 %s20, 1
    %s22 = scalar_select %p19, %s20, %s21
    %p25 = pneg %p19
    %p26 = scmp.eq.s32.totalorder %s10, 1
    %p27 = por %p25, %p26
    %p28 = scmp.ne.s32.totalorder %s20, %s23
    %p29 = scmp.eq.s32.totalorder %s10, 0
    %p30 = por %p28, %p29
    %p31 = scmp.ne.s32.totalorder %s20, %s23
    %p32 = scmp.eq.s32.totalorder %s15, 1
    %p33 = por %p31, %p32
    %p34 = scmp.ne.s32.totalorder %s23, %s24
    %p35 = scmp.eq.s32.totalorder %s15, 0
    %p36 = por %p34, %p35
    %p37 = scmp.ne.s32.totalorder %s23, %s24
    %p38 = scmp.eq.s32.totalorder %s16, 1
    %p39 = por %p37, %p38
    %p41 = scmp.ne.s32.totalorder %s24, %s40
    %p42 = scmp.eq.s32.totalorder %s16, 0
    %p43 = por %p41, %p42
    %s45 = sadd.s32 %s44, 1
    %p48 = scmp.eq.s32.totalorder %s10, 1
    %p49 = scmp.ne.s32.totalorder %s44, %s46
    %p50 = scmp.eq.s32.totalorder %s10, 0
    %p51 = por %p49, %p50
    %p52 = scmp.ne.s32.totalorder %s44, %s46
    %p53 = scmp.eq.s32.totalorder %s15, 1
    %p54 = por %p52, %p53
    %p55 = scmp.ne.s32.totalorder %s46, %s47
    %p56 = scmp.eq.s32.totalorder %s15, 0
    %p57 = por %p55, %p56
    %p58 = scmp.ne.s32.totalorder %s46, %s47
    %p59 = scmp.eq.s32.totalorder %s16, 1
    %p60 = por %p58, %p59
    %p62 = scmp.ne.s32.totalorder %s47, %s61
    %p63 = scmp.eq.s32.totalorder %s16, 0
    %p64 = por %p62, %p63
    %s66 = sadd.s32 %s65, 1
    %p69 = scmp.eq.s32.totalorder %s10, 1
    %p70 = scmp.ne.s32.totalorder %s65, %s67
    %p71 = scmp.eq.s32.totalorder %s10, 0
    %p72 = por %p70, %p71
    %p73 = scmp.ne.s32.totalorder %s65, %s67
    %p74 = scmp.eq.s32.totalorder %s15, 1
    %p75 = por %p73, %p74
    %p76 = scmp.ne.s32.totalorder %s67, %s68
    %p77 = scmp.eq.s32.totalorder %s15, 0
    %p78 = por %p76, %p77
    %p79 = scmp.ne.s32.totalorder %s67, %s68
    %p80 = scmp.eq.s32.totalorder %s16, 1
    %p81 = por %p79, %p80
    %p83 = scmp.ne.s32.totalorder %s68, %s82
    %p84 = scmp.eq.s32.totalorder %s16, 0
    %p85 = por %p83, %p84
    %s87 = sadd.s32 %s86, 1
    %p90 = scmp.eq.s32.totalorder %s10, 1
    %p91 = scmp.ne.s32.totalorder %s86, %s88
    %p92 = scmp.eq.s32.totalorder %s10, 0
    %p93 = por %p91, %p92
    %p94 = scmp.ne.s32.totalorder %s86, %s88
    %p95 = scmp.eq.s32.totalorder %s15, 1
    %p96 = por %p94, %p95
    %p97 = scmp.ne.s32.totalorder %s88, %s89
    %p98 = scmp.eq.s32.totalorder %s15, 0
    %p99 = por %p97, %p98
    %p100 = scmp.ne.s32.totalorder %s88, %s89
    %p101 = scmp.eq.s32.totalorder %s16, 1
    %p102 = por %p100, %p101
    %p104 = scmp.ne.s32.totalorder %s89, %s103
    %p105 = scmp.eq.s32.totalorder %s16, 0
    %p106 = por %p104, %p105
    %s107 = ssub.s32 %s10, %s17
    %p108 = scmp.eq.s32.totalorder %s107, 0
    %s110 = sadd.s32 %s109, 1
    %s111 = scalar_select %p108, %s109, %s110
    %p114 = pneg %p108
    %p115 = scmp.eq.s32.totalorder %s10, 1
    %p116 = por %p114, %p115
    %p117 = scmp.ne.s32.totalorder %s109, %s112
    %p118 = scmp.eq.s32.totalorder %s10, 0
    %p119 = por %p117, %p118
    %p120 = scmp.ne.s32.totalorder %s109, %s112
    %p121 = scmp.eq.s32.totalorder %s15, 1
    %p122 = por %p120, %p121
    %p123 = scmp.ne.s32.totalorder %s112, %s113
    %p124 = scmp.eq.s32.totalorder %s15, 0
    %p125 = por %p123, %p124
    %p126 = scmp.ne.s32.totalorder %s112, %s113
    %p127 = scmp.eq.s32.totalorder %s16, 1
    %p128 = por %p126, %p127
    %p130 = scmp.ne.s32.totalorder %s113, %s129
    %p131 = scmp.eq.s32.totalorder %s16, 0
    %p132 = por %p130, %p131
    %p133 = scmp.le.s32.totalorder 1, %s10
    %p134 = scmp.lt.s32.totalorder %s10, 3
    %p135 = pnand %p133, %p134
    %p136 = pneg %p135
    // Predicated region
    $region9: #{dense_transition.1} parent=5 // pred_check
      _
    $region10: #{dense_transition.1} parent=5 // pred_check_branch
      %138 = sbr.rel (%p135) target = $region12
    $region11: #{dense_transition.1} parent=5 // pred_region
      %s139 = ssub.s32 %s10, 1
      // Predicated region
      $region13: #{dense_transition.1} parent=11 // pred_check
        %p140 = pneg %p57
      $region14: #{dense_transition.1} parent=11 // pred_check_branch
        %142 = sbr.rel (%p140) target = $region16
      $region15: #{dense_transition.1} parent=11 // pred_region
        _
      $region16: #{dense_transition.1} parent=11 // pred_fallthru
        _
      // Predicated region
      $region17: #{dense_transition.1} parent=11 // pred_check
        %p143 = pneg %p78
      $region18: #{dense_transition.1} parent=11 // pred_check_branch
        %145 = sbr.rel (%p143) target = $region20
      $region19: #{dense_transition.1} parent=11 // pred_region
        _
      $region20: #{dense_transition.1} parent=11 // pred_fallthru
        _
      // Predicated region
      $region21: #{dense_transition.1} parent=11 // pred_check
        %p146 = pneg %p99
      $region22: #{dense_transition.1} parent=11 // pred_check_branch
        %148 = sbr.rel (%p146) target = $region24
      $region23: #{dense_transition.1} parent=11 // pred_region
        _
      $region24: #{dense_transition.1} parent=11 // pred_fallthru
        _
    $region12: #{dense_transition.1} parent=5 // pred_fallthru
      _
    %p149 = scmp.lt.s32.totalorder %s10, 2
    // Predicated region
    $region25: #{dense_transition.1} parent=5 // pred_check
      %p150 = pneg %p149
    $region26: #{dense_transition.1} parent=5 // pred_check_branch
      %152 = sbr.rel (%p150) target = $region28
    $region27: #{dense_transition.1} parent=5 // pred_region
      // Predicated region
      $region29: #{dense_transition.1} parent=27 // pred_check
        %p153 = pneg %p30
      $region30: #{dense_transition.1} parent=27 // pred_check_branch
        %155 = sbr.rel (%p153) target = $region32
      $region31: #{dense_transition.1} parent=27 // pred_region
        %s156 = smul.u32 16, %s10
        %p157 = scmp.lt.s32.totalorder %s156, 31
        %s158 = scalar_select %p157, %s156, 31
        %s159 = smul.addr %s158, 8
        %s160 = scalar_lea.vmem %s0, %s159
        %s161 = smul.u32 16, %s10
      $region32: #{dense_transition.1} parent=27 // pred_fallthru
        _
    $region28: #{dense_transition.1} parent=5 // pred_fallthru
      _
    %p162 = scmp.le.s32.totalorder 1, %s10
    %p163 = scmp.lt.s32.totalorder %s10, 3
    %p164 = pnand %p162, %p163
    %p165 = pneg %p164
    // Predicated region
    $region33: #{dense_transition.1} parent=5 // pred_check
      _
    $region34: #{dense_transition.1} parent=5 // pred_check_branch
      %167 = sbr.rel (%p164) target = $region36
    $region35: #{dense_transition.1} parent=5 // pred_region
      %s168 = ssub.s32 %s10, 1
      %s169 = smul.u32 16, %s15
      %p170 = scmp.lt.s32.totalorder %s169, 31
      %s171 = scalar_select %p170, %s169, 31
      %s172 = smul.addr %s171, 8
      %s173 = scalar_lea.vmem %s0, %s172
      %p174 = pneg %p36
      %p175 = pneg %p33
      %p176 = pneg %p57
      %p177 = pneg %p54
      %p178 = pneg %p78
      %p179 = pneg %p75
      %p180 = pneg %p99
      %p181 = pneg %p96
      %p182 = pneg %p125
      %p183 = pneg %p122
      %s184 = smul.u32 8, %s15
      %p185 = scmp.lt.s32.totalorder %s184, 15
      %s186 = scalar_select %p185, %s184, 15
      %s187 = smul.addr %s186, 8
      %s188 = scalar_lea.vmem %s4, %s187
      %s189 = smul.u32 16, %s15
      %p190 = scmp.lt.s32.totalorder %s189, 31
      %s191 = scalar_select %p190, %s189, 31
      %s192 = smul.addr %s191, 8
      %s193 = scalar_lea.vmem %s0, %s192
      %s194 = smul.u32 16, %s15
      %s195 = smul.u32 8, %s15
      %p196 = scmp.lt.s32.totalorder %s195, 15
      %s197 = scalar_select %p196, %s195, 15
      %s198 = smul.addr %s197, 8
      %s199 = scalar_lea.vmem %s4, %s198
      %s200 = smul.u32 8, %s15
      %v201 = vld [vmem:[%s193] sm:$0xff]
      %v202 = vld [vmem:[%s193 + $0x8] sm:$0xff]
      %v203 = vld [vmem:[%s193 + $0x10] sm:$0xff]
      %v204 = vld [vmem:[%s193 + $0x18] sm:$0xff]
      %v205 = vld [vmem:[%s193 + $0x20] sm:$0xff]
      %v206 = vld [vmem:[%s193 + $0x28] sm:$0xff]
      %v207 = vld [vmem:[%s193 + $0x30] sm:$0xff]
      %v208 = vld [vmem:[%s193 + $0x38] sm:$0xff]
      %v209 = vld [vmem:[%s193 + $0x40] sm:$0xff]
      %v210 = vld [vmem:[%s193 + $0x48] sm:$0xff]
      %v211 = vld [vmem:[%s193 + $0x50] sm:$0xff]
      %v212 = vld [vmem:[%s193 + $0x58] sm:$0xff]
      %v213 = vld [vmem:[%s193 + $0x60] sm:$0xff]
      %v214 = vld [vmem:[%s193 + $0x68] sm:$0xff]
      %v215 = vld [vmem:[%s193 + $0x70] sm:$0xff]
      %v216 = vld [vmem:[%s193 + $0x78] sm:$0xff]
      %v217 = vld [vmem:[%s1] sm:$0x1]
      %v218 = vld [vmem:[%s2] sm:$0x1]
      %v220 = vlaneseq
      %v221 = vshrl.u32 %v220, 7
      %v222 = vsub.s32 0, %v221
      %v223 = vrot.slane %v217, %v222
      %v225 = vmul.f32 %v201, %v223
      %v226 = vmul.f32 %v202, %v223
      %v227 = vmul.f32 %v203, %v223
      %v228 = vmul.f32 %v204, %v223
      %v229 = vmul.f32 %v205, %v223
      %v230 = vmul.f32 %v206, %v223
      %v231 = vmul.f32 %v207, %v223
      %v232 = vmul.f32 %v208, %v223
      %v233 = vmul.f32 %v209, %v223
      %v234 = vmul.f32 %v210, %v223
      %v235 = vmul.f32 %v211, %v223
      %v236 = vmul.f32 %v212, %v223
      %v237 = vmul.f32 %v213, %v223
      %v238 = vmul.f32 %v214, %v223
      %v239 = vmul.f32 %v215, %v223
      %v240 = vmul.f32 %v216, %v223
      %v242 = vlaneseq
      %v243 = vshrl.u32 %v242, 7
      %v244 = vsub.s32 0, %v243
      %v245 = vrot.slane %v218, %v244
      %v247 = vadd.f32 %v225, %v245
      %v248 = vadd.f32 %v226, %v245
      %v249 = vadd.f32 %v227, %v245
      %v250 = vadd.f32 %v228, %v245
      %v251 = vadd.f32 %v229, %v245
      %v252 = vadd.f32 %v230, %v245
      %v253 = vadd.f32 %v231, %v245
      %v254 = vadd.f32 %v232, %v245
      %v255 = vadd.f32 %v233, %v245
      %v256 = vadd.f32 %v234, %v245
      %v257 = vadd.f32 %v235, %v245
      %v258 = vadd.f32 %v236, %v245
      %v259 = vadd.f32 %v237, %v245
      %v260 = vadd.f32 %v238, %v245
      %v261 = vadd.f32 %v239, %v245
      %v262 = vadd.f32 %v240, %v245
      %v263 = vmax.f32 %v247, 0.0
      %v264 = vmax.f32 %v248, 0.0
      %v265 = vmax.f32 %v249, 0.0
      %v266 = vmax.f32 %v250, 0.0
      %v267 = vmax.f32 %v251, 0.0
      %v268 = vmax.f32 %v252, 0.0
      %v269 = vmax.f32 %v253, 0.0
      %v270 = vmax.f32 %v254, 0.0
      %v271 = vmax.f32 %v255, 0.0
      %v272 = vmax.f32 %v256, 0.0
      %v273 = vmax.f32 %v257, 0.0
      %v274 = vmax.f32 %v258, 0.0
      %v275 = vmax.f32 %v259, 0.0
      %v276 = vmax.f32 %v260, 0.0
      %v277 = vmax.f32 %v261, 0.0
      %v278 = vmax.f32 %v262, 0.0
      %v279 = vadd.f32 %v263, %v264
      %v280 = vadd.f32 %v265, %v266
      %v281 = vadd.f32 %v267, %v268
      %v282 = vadd.f32 %v269, %v270
      %v283 = vadd.f32 %v271, %v272
      %v284 = vadd.f32 %v273, %v274
      %v285 = vadd.f32 %v275, %v276
      %v286 = vadd.f32 %v277, %v278
      %v287 = vld [vmem:[%s3] sm:$0xff]
      %vm288 = vcmask 64512
      %v290 = vsel %vm288, %v279, 0
      %v293 = vsel %vm288, %v280, 0
      %v296 = vsel %vm288, %v281, 0
      %v299 = vsel %vm288, %v282, 0
      %v302 = vsel %vm288, %v283, 0
      %v305 = vsel %vm288, %v284, 0
      %v308 = vsel %vm288, %v285, 0
      %v311 = vsel %vm288, %v286, 0
      %313 = vmatprep.subr.mxu0 0.0
      %314 = vmatpush1.msra.mxu0 %v287
      %315 = vmatprep.subr.mxu0 0.0
      %316 = vmatpush1.msra.mxu0 0.0
      %317 = vmatprep.subr.mxu0 0.0
      %318 = vmatpush1.msra.mxu0 0.0
      %319 = vmatprep.subr.mxu0 0.0
      %320 = vmatpush1.msra.mxu0 0.0
      %321 = vmatprep.subr.mxu0 0.0
      %322 = vmatpush1.msra.mxu0 0.0
      %323 = vmatprep.subr.mxu0 0.0
      %324 = vmatpush1.msra.mxu0 0.0
      %325 = vmatprep.subr.mxu0 0.0
      %326 = vmatpush1.msra.mxu0 0.0
      %327 = vmatprep.subr.mxu0 0.0
      %328 = vmatpush1.msra.mxu0 0.0
      %329 = vmatprep.subr.mxu0 0.0
      %330 = vmatpush1.msra.mxu0 0.0
      %331 = vmatprep.subr.mxu0 0.0
      %332 = vmatpush1.msra.mxu0 0.0
      %333 = vmatprep.subr.mxu0 0.0
      %334 = vmatpush1.msra.mxu0 0.0
      %335 = vmatprep.subr.mxu0 0.0
      %336 = vmatpush1.msra.mxu0 0.0
      %337 = vmatprep.subr.mxu0 0.0
      %338 = vmatpush1.msra.mxu0 0.0
      %339 = vmatprep.subr.mxu0 0.0
      %340 = vmatpush1.msra.mxu0 0.0
      %341 = vmatprep.subr.mxu0 0.0
      %342 = vmatpush1.msra.mxu0 0.0
      %343 = vmatprep.subr.mxu0 0.0
      %344 = vmatpush1.msra.mxu0 0.0
      %345 = vmatprep.subr.mxu0 0.0
      %346 = vmatpush1.msra.mxu0 0.0
      %347 = vmatprep.subr.mxu0 0.0
      %348 = vmatpush1.msra.mxu0 0.0
      %349 = vmatprep.subr.mxu0 0.0
      %350 = vmatpush1.msra.mxu0 0.0
      %351 = vmatprep.subr.mxu0 0.0
      %352 = vmatpush1.msra.mxu0 0.0
      %353 = vmatprep.subr.mxu0 0.0
      %354 = vmatpush1.msra.mxu0 0.0
      %355 = vmatprep.subr.mxu0 0.0
      %356 = vmatpush1.msra.mxu0 0.0
      %357 = vmatprep.subr.mxu0 0.0
      %358 = vmatpush1.msra.mxu0 0.0
      %359 = vmatprep.subr.mxu0 0.0
      %360 = vmatpush1.msra.mxu0 0.0
      %361 = vmatprep.subr.mxu0 0.0
      %362 = vmatpush1.msra.mxu0 0.0
      %363 = vmatprep.subr.mxu0 0.0
      %364 = vmatpush1.msra.mxu0 0.0
      %365 = vmatprep.subr.mxu0 0.0
      %366 = vmatpush1.msra.mxu0 0.0
      %367 = vmatprep.subr.mxu0 0.0
      %368 = vmatpush1.msra.mxu0 0.0
      %369 = vmatprep.subr.mxu0 0.0
      %370 = vmatpush1.msra.mxu0 0.0
      %371 = vmatprep.subr.mxu0 0.0
      %372 = vmatpush1.msra.mxu0 0.0
      %373 = vmatprep.subr.mxu0 0.0
      %374 = vmatpush1.msra.mxu0 0.0
      %375 = vmatprep.subr.mxu0 0.0
      %376 = vmatpush1.msra.mxu0 0.0
      %377 = vmatprep.mubr.f32.mxu0 0.0
      %378 = vmatmul.mubr.f32.gmra.mrb[0].mxu0 %v290
      %v379 = vpop.f32.mrb[0].mxu0
      %v380 = vadd.f32 0.0, %v379
      %v381 = vpop.f32.mrb[0].mxu0
      %382 = vmatprep.mubr.f32.mxu0 0.0
      %383 = vmatmul.mubr.f32.gmra.mrb[0].mxu0 %v293
      %v384 = vpop.f32.mrb[0].mxu0
      %v385 = vadd.f32 0.0, %v384
      %v386 = vpop.f32.mrb[0].mxu0
      %387 = vmatprep.mubr.f32.mxu0 0.0
      %388 = vmatmul.mubr.f32.gmra.mrb[0].mxu0 %v296
      %v389 = vpop.f32.mrb[0].mxu0
      %v390 = vadd.f32 0.0, %v389
      %v391 = vpop.f32.mrb[0].mxu0
      %392 = vmatprep.mubr.f32.mxu0 0.0
      %393 = vmatmul.mubr.f32.gmra.mrb[0].mxu0 %v299
      %v394 = vpop.f32.mrb[0].mxu0
      %v395 = vadd.f32 0.0, %v394
      %v396 = vpop.f32.mrb[0].mxu0
      %397 = vmatprep.mubr.f32.mxu0 0.0
      %398 = vmatmul.mubr.f32.gmra.mrb[0].mxu0 %v302
      %v399 = vpop.f32.mrb[0].mxu0
      %v400 = vadd.f32 0.0, %v399
      %v401 = vpop.f32.mrb[0].mxu0
      %402 = vmatprep.mubr.f32.mxu0 0.0
      %403 = vmatmul.mubr.f32.gmra.mrb[0].mxu0 %v305
      %v404 = vpop.f32.mrb[0].mxu0
      %v405 = vadd.f32 0.0, %v404
      %v406 = vpop.f32.mrb[0].mxu0
      %407 = vmatprep.mubr.f32.mxu0 0.0
      %408 = vmatmul.mubr.f32.gmra.mrb[0].mxu0 %v308
      %v409 = vpop.f32.mrb[0].mxu0
      %v410 = vadd.f32 0.0, %v409
      %v411 = vpop.f32.mrb[0].mxu0
      %412 = vmatprep.mubr.f32.mxu0 0.0
      %413 = vmatmul.mubr.f32.gmra.mrb[0].mxu0 %v311
      %v414 = vpop.f32.mrb[0].mxu0
      %v415 = vadd.f32 0.0, %v414
      %v416 = vpop.f32.mrb[0].mxu0
      %417 = vdwg.mxu0
      %418 = vst.msk [vmem:[%s199] sm:$0xff] %vm288, %v380
      %419 = vst.msk [vmem:[%s199 + $0x8] sm:$0xff] %vm288, %v385
      %420 = vst.msk [vmem:[%s199 + $0x10] sm:$0xff] %vm288, %v390
      %421 = vst.msk [vmem:[%s199 + $0x18] sm:$0xff] %vm288, %v395
      %422 = vst.msk [vmem:[%s199 + $0x20] sm:$0xff] %vm288, %v400
      %423 = vst.msk [vmem:[%s199 + $0x28] sm:$0xff] %vm288, %v405
      %424 = vst.msk [vmem:[%s199 + $0x30] sm:$0xff] %vm288, %v410
      %425 = vst.msk [vmem:[%s199 + $0x38] sm:$0xff] %vm288, %v415
      %s426 = smul.u32 8, %s15
      %p427 = scmp.lt.s32.totalorder %s426, 15
      %s428 = scalar_select %p427, %s426, 15
      %s429 = smul.addr %s428, 8
      %s430 = scalar_lea.vmem %s4, %s429
      // Predicated region
      $region37: #{dense_transition.1} parent=35 // pred_check
        %p431 = pneg %p122
      $region38: #{dense_transition.1} parent=35 // pred_check_branch
        %433 = sbr.rel (%p431) target = $region40
      $region39: #{dense_transition.1} parent=35 // pred_region
        %s434 = smul.u32 8, %s15
      $region40: #{dense_transition.1} parent=35 // pred_fallthru
        _
    $region36: #{dense_transition.1} parent=5 // pred_fallthru
      _
    %p435 = scmp.le.s32.totalorder 2, %s10
    // Predicated region
    $region41: #{dense_transition.1} parent=5 // pred_check
      %p436 = pneg %p435
    $region42: #{dense_transition.1} parent=5 // pred_check_branch
      %438 = sbr.rel (%p436) target = $region44
    $region43: #{dense_transition.1} parent=5 // pred_region
      %s439 = ssub.s32 %s10, 2
      // Predicated region
      $region45: #{dense_transition.1} parent=43 // pred_check
        %p440 = pneg %p128
      $region46: #{dense_transition.1} parent=43 // pred_check_branch
        %442 = sbr.rel (%p440) target = $region48
      $region47: #{dense_transition.1} parent=43 // pred_region
        %s443 = smul.u32 8, %s16
        %p444 = scmp.lt.s32.totalorder %s443, 15
        %s445 = scalar_select %p444, %s443, 15
        %s446 = smul.addr %s445, 8
        %s447 = scalar_lea.vmem %s4, %s446
      $region48: #{dense_transition.1} parent=43 // pred_fallthru
        _
    $region44: #{dense_transition.1} parent=5 // pred_fallthru
      _
  $region6: #{dense_transition.1} parent=0 // loop_footer
    %s14 = sadd.s32 1, %s10
  $region7: #{dense_transition.1} parent=0 // loop_footer_branch
    %9 = sbr.rel target = $region3
  $region8: #{dense_transition.1} parent=0 // loop_exit
    _

</llo_original>
